<compile_context>
chip_gen: v5e
topology: v5e:2x2
jax: 0.10.0
libtpu: 0.0.40
codegen_flags: <defaults>
</compile_context>

<pallas_src>
import functools

import jax
import jax.numpy as jnp
from jax import lax
from jax.experimental import pallas as pl
from jax.experimental.pallas import tpu as pltpu

LANE = 128                       # vreg lane width
ACC_ROWS = 32                    # accumulator sublanes -> 4 independent (8,128) add chains
BLOCK_BYTES = 4 * 1024 * 1024    # ~4 MiB per stream per grid step
NUM_CORE_SPLITS = 2              # leading "parallel" axis: 2 TCs on v7x, harmless on v5e/v6e


def _block_rows_for(body_rows, itemsize):
    """Rows per block: whole array if small, else a ~4 MiB multiple of ACC_ROWS."""
    budget = (BLOCK_BYTES // (LANE * itemsize)) // ACC_ROWS * ACC_ROWS
    budget = max(budget, ACC_ROWS)
    if body_rows <= budget:
        return body_rows           # single full-extent block (always a legal BlockSpec)
    return budget                  # multiple of ACC_ROWS (and of 8)


def _accumulate(x_ref, acc_ref, *, sign, b, rows, block_rows, nblk, total_steps):
    """acc += per-(sublane, lane) partial sums of relu(1 + sign * x) for block b."""
    if nblk == 0:                  # stream fits entirely in the <128-elem wrapper tail
        return

    def compute(mask_tail):
        x = x_ref[...].astype(jnp.float32)         # in-kernel cast (halves HBM bytes for bf16)
        hinge = jnp.maximum(1.0 + sign * x, 0.0)
        if mask_tail:
            # Only the single partial tail block pays for iota/cmp/select.
            row_ids = (nblk - 1) * block_rows + lax.broadcasted_iota(
                jnp.int32, hinge.shape, 0)
            hinge = jnp.where(row_ids < rows, hinge, 0.0)
        if block_rows % ACC_ROWS == 0:
            # Pure VPU adds into ACC_ROWS//8 = 4 independent vreg chains; the
            # XLU/cross-lane reduce is deferred to the tiny wrapper epilogue.
            acc_ref[...] += jnp.sum(
                hinge.reshape(block_rows // ACC_ROWS, ACC_ROWS, LANE), axis=0)
        elif block_rows % 8 == 0:
            acc_ref[0:8, :] += jnp.sum(
                hinge.reshape(block_rows // 8, 8, LANE), axis=0)
        else:
            # Tiny single-block stream (< 8 rows or not 8-aligned).
            acc_ref[0:1, :] += jnp.sum(hinge, axis=0, keepdims=True)

    has_tail = (rows % block_rows) != 0            # only possible when nblk > 1

    if not has_tail:
        if nblk == total_steps:
            compute(mask_tail=False)               # every grid step owns a full block
        else:
            @pl.when(b < nblk)                     # skip duplicate/empty steps entirely
            def _():
                compute(mask_tail=False)
    else:
        @pl.when(b < nblk - 1)                     # unmasked fast path for full blocks
        def _():
            compute(mask_tail=False)

        @pl.when(b == nblk - 1)                    # masked path only for the tail block
        def _():
            compute(mask_tail=True)


def _hinge_loss_kernel(real_ref, fake_ref, out_r_ref, out_f_ref, *,
                       real_meta, fake_meta, blocks_per_core):
    c = pl.program_id(0)                           # core-split ("parallel") axis
    i = pl.program_id(1)                           # row-block ("arbitrary") axis
    b = c * blocks_per_core + i                    # logical row-block index
    total_steps = NUM_CORE_SPLITS * blocks_per_core

    @pl.when(i == 0)
    def _():                                       # per-core accumulator init
        out_r_ref[...] = jnp.zeros_like(out_r_ref)
        out_f_ref[...] = jnp.zeros_like(out_f_ref)

    rows_r, br_r, nblk_r = real_meta
    rows_f, br_f, nblk_f = fake_meta
    _accumulate(real_ref, out_r_ref, sign=-1.0, b=b, rows=rows_r,
                block_rows=br_r, nblk=nblk_r, total_steps=total_steps)
    _accumulate(fake_ref, out_f_ref, sign=+1.0, b=b, rows=rows_f,
                block_rows=br_f, nblk=nblk_f, total_steps=total_steps)


def _index_map(nblk, blocks_per_core):
    if nblk == 0:
        return lambda c, i: (0, 0)                 # dummy block, compute is gated off
    if nblk == NUM_CORE_SPLITS * blocks_per_core:
        return lambda c, i: (c * blocks_per_core + i, 0)
    # Clamp so the DMA stays in bounds; pl.when skips the compute and the
    # unchanged block index suppresses re-fetches on the extra steps.
    return lambda c, i: (jnp.minimum(c * blocks_per_core + i, nblk - 1), 0)


def _prep(x):
    """Lane-aligned (rows, 128) body (free reshape when numel % 128 == 0)
    plus the <128-element ragged tail (handled in the wrapper)."""
    flat = jnp.ravel(x)
    rows = flat.size // LANE
    n_aligned = rows * LANE
    if rows > 0:
        # TODO(synk): when numel % 128 != 0, XLA may materialize this prefix
        # slice as one copy; a manual-DMA variant on a 1-D HBM ref would avoid
        # even that, at the cost of hand-rolled pipelining.
        body = flat[:n_aligned].reshape(rows, LANE)
    else:
        body = jnp.zeros((8, LANE), x.dtype)       # dummy, never accumulated (nblk == 0)
    tail = flat[n_aligned:]                        # static-size slice, < 128 elements
    return body, rows, tail


def _tail_sum(tail, sign):
    if tail.size == 0:
        return jnp.float32(0.0)
    return jnp.sum(jnp.maximum(1.0 + sign * tail.astype(jnp.float32), 0.0))


@jax.jit
def hinge_gan_d_loss(scores_real, scores_fake):
    n_real = scores_real.size
    n_fake = scores_fake.size

    real2, rows_r, tail_r = _prep(scores_real)
    fake2, rows_f, tail_f = _prep(scores_fake)

    br_r = _block_rows_for(real2.shape[0], real2.dtype.itemsize)
    br_f = _block_rows_for(fake2.shape[0], fake2.dtype.itemsize)
    nblk_r = pl.cdiv(rows_r, br_r) if rows_r > 0 else 0
    nblk_f = pl.cdiv(rows_f, br_f) if rows_f > 0 else 0
    blocks_per_core = max(1, pl.cdiv(max(nblk_r, nblk_f), NUM_CORE_SPLITS))

    kernel = functools.partial(
        _hinge_loss_kernel,
        real_meta=(rows_r, br_r, nblk_r),
        fake_meta=(rows_f, br_f, nblk_f),
        blocks_per_core=blocks_per_core,
    )

    out_rows = NUM_CORE_SPLITS * ACC_ROWS
    bytes_accessed = (real2.size * real2.dtype.itemsize
                      + fake2.size * fake2.dtype.itemsize
                      + 2 * out_rows * LANE * 4)

    partial_r, partial_f = pl.pallas_call(
        kernel,
        out_shape=(
            jax.ShapeDtypeStruct((out_rows, LANE), jnp.float32),
            jax.ShapeDtypeStruct((out_rows, LANE), jnp.float32),
        ),
        grid=(NUM_CORE_SPLITS, blocks_per_core),
        in_specs=[
            pl.BlockSpec((br_r, LANE), _index_map(nblk_r, blocks_per_core)),
            pl.BlockSpec((br_f, LANE), _index_map(nblk_f, blocks_per_core)),
        ],
        # Per-core resident accumulator blocks, written back when the core axis
        # advances (or the grid ends).
        out_specs=[
            pl.BlockSpec((ACC_ROWS, LANE), lambda c, i: (c, 0)),
            pl.BlockSpec((ACC_ROWS, LANE), lambda c, i: (c, 0)),
        ],
        compiler_params=pltpu.CompilerParams(
            dimension_semantics=("parallel", "arbitrary"),
            vmem_limit_bytes=32 * 1024 * 1024,     # 16 MiB of stream buffers + headroom
        ),
        cost_estimate=pl.CostEstimate(
            flops=4 * (n_real + n_fake),
            transcendentals=0,
            bytes_accessed=bytes_accessed,
        ),
    )(real2, fake2)

    # Tiny epilogue: cross-lane/sublane reduce of the (2*32, 128) partials,
    # ragged tails, 1/n scaling and the real+fake combine.
    sum_r = jnp.sum(partial_r) + _tail_sum(tail_r, -1.0)
    sum_f = jnp.sum(partial_f) + _tail_sum(tail_f, +1.0)
    return sum_r / n_real + sum_f / n_fake


def _reference(scores_real, scores_fake):
    r = scores_real.reshape(-1).astype(jnp.float32)
    f = scores_fake.reshape(-1).astype(jnp.float32)
    return (jnp.mean(jax.nn.relu(1.0 - r)) + jnp.mean(jax.nn.relu(1.0 + f)))


if __name__ == "__main__":
    key = jax.random.PRNGKey(0)
    k_real, k_fake, k_real2, k_fake2 = jax.random.split(key, 4)

    # Typical patch-discriminator score maps (NCHW).
    real = jax.random.normal(k_real, (2, 1, 16, 16), dtype=jnp.float32)
    fake = jax.random.normal(k_fake, (2, 1, 16, 16), dtype=jnp.float32)

    loss = jax.block_until_ready(hinge_gan_d_loss(real, fake))
    ref = _reference(real, fake)
    assert jnp.allclose(loss, ref, rtol=1e-5, atol=1e-6), (loss, ref)

    # Odd sizes: exercises the no-pad ragged-tail path (numel % 128 != 0).
    real_o = jax.random.normal(k_real2, (2, 1, 15, 15), dtype=jnp.float32)
    fake_o = jax.random.normal(k_fake2, (3, 1, 9, 9), dtype=jnp.float32)
    loss_o = jax.block_until_ready(hinge_gan_d_loss(real_o, fake_o))
    ref_o = _reference(real_o, fake_o)
    assert jnp.allclose(loss_o, ref_o, rtol=1e-5, atol=1e-6), (loss_o, ref_o)

    print("KERNEL_OK")
</pallas_src>

<mosaic_0001>
module attributes {stable_mosaic.version = 11 : i64} {
  func.func @_hinge_loss_kernel(%arg0: i32, %arg1: i32, %arg2: memref<4x128xf32, #tpu.memory_space<vmem>>, %arg3: memref<4x128xf32, #tpu.memory_space<vmem>>, %arg4: memref<32x128xf32, #tpu.memory_space<vmem>>, %arg5: memref<32x128xf32, #tpu.memory_space<vmem>>) attributes {dimension_semantics = [#tpu.dimension_semantics<parallel>, #tpu.dimension_semantics<arbitrary>], iteration_bounds = array<i64: 2, 1>, scalar_prefetch = 0 : i64, scratch_operands = 0 : i64, tpu.core_type = #tpu.core_type<tc>, window_params = [{transform_indices = @transform_0, window_bounds = array<i64: 4, 128>}, {transform_indices = @transform_1, window_bounds = array<i64: 4, 128>}, {transform_indices = @transform_2, window_bounds = array<i64: 32, 128>}, {transform_indices = @transform_3, window_bounds = array<i64: 32, 128>}]} {
    %c1_i32 = arith.constant 1 : i32
    %0 = arith.muli %arg0, %c1_i32 : i32
    %1 = arith.addi %0, %arg1 : i32
    %c0_i32 = arith.constant 0 : i32
    %2 = arith.cmpi eq, %arg1, %c0_i32 : i32
    %3 = arith.extui %2 : i1 to i32
    %c0_i32_0 = arith.constant 0 : i32
    %4 = arith.cmpi ne, %3, %c0_i32_0 : i32
    scf.if %4 {
      %cst = arith.constant 0.000000e+00 : f32
      %11 = vector.broadcast %cst : f32 to vector<32x128xf32>
      %c0 = arith.constant 0 : index
      %c0_5 = arith.constant 0 : index
      %12 = vector.load %arg4[%c0, %c0_5] : memref<32x128xf32, #tpu.memory_space<vmem>>, vector<32x128xf32>
      tpu.vector_store %arg4[%c0, %c0_5], %11 {strides = array<i32>} : memref<32x128xf32, #tpu.memory_space<vmem>>, vector<32x128xf32>,
      %cst_6 = arith.constant 0.000000e+00 : f32
      %13 = vector.broadcast %cst_6 : f32 to vector<32x128xf32>
      %c0_7 = arith.constant 0 : index
      %c0_8 = arith.constant 0 : index
      %14 = vector.load %arg5[%c0_7, %c0_8] : memref<32x128xf32, #tpu.memory_space<vmem>>, vector<32x128xf32>
      tpu.vector_store %arg5[%c0_7, %c0_8], %13 {strides = array<i32>} : memref<32x128xf32, #tpu.memory_space<vmem>>, vector<32x128xf32>,
    } else {
    }
    %c1_i32_1 = arith.constant 1 : i32
    %5 = arith.cmpi slt, %1, %c1_i32_1 : i32
    %6 = arith.extui %5 : i1 to i32
    %c0_i32_2 = arith.constant 0 : i32
    %7 = arith.cmpi ne, %6, %c0_i32_2 : i32
    scf.if %7 {
      %c0 = arith.constant 0 : index
      %c0_5 = arith.constant 0 : index
      %11 = vector.load %arg2[%c0, %c0_5] : memref<4x128xf32, #tpu.memory_space<vmem>>, vector<4x128xf32>
      %cst = arith.constant -1.000000e+00 : f32
      %12 = vector.broadcast %cst : f32 to vector<4x128xf32>
      %13 = arith.mulf %12, %11 : vector<4x128xf32>
      %cst_6 = arith.constant 1.000000e+00 : f32
      %14 = vector.broadcast %cst_6 : f32 to vector<4x128xf32>
      %15 = arith.addf %14, %13 : vector<4x128xf32>
      %cst_7 = arith.constant 0.000000e+00 : f32
      %16 = vector.broadcast %cst_7 : f32 to vector<4x128xf32>
      %17 = arith.maximumf %15, %16 : vector<4x128xf32>
      %c0_8 = arith.constant 0 : index
      %c0_9 = arith.constant 0 : index
      %18 = vector.load %arg4[%c0_8, %c0_9] : memref<32x128xf32, #tpu.memory_space<vmem>>, vector<1x128xf32>
      %cst_10 = arith.constant dense<0.000000e+00> : vector<128xf32>
      %19 = vector.multi_reduction <add>, %17, %cst_10 [0] : vector<4x128xf32> to vector<128xf32>
      %20 = vector.shape_cast %19 : vector<128xf32> to vector<1x128xf32>
      %21 = arith.addf %18, %20 : vector<1x128xf32>
      %c0_11 = arith.constant 0 : index
      %c0_12 = arith.constant 0 : index
      %22 = vector.load %arg4[%c0_11, %c0_12] : memref<32x128xf32, #tpu.memory_space<vmem>>, vector<1x128xf32>
      tpu.vector_store %arg4[%c0_11, %c0_12], %21 {strides = array<i32>} : memref<32x128xf32, #tpu.memory_space<vmem>>, vector<1x128xf32>,
    } else {
    }
    %c1_i32_3 = arith.constant 1 : i32
    %8 = arith.cmpi slt, %1, %c1_i32_3 : i32
    %9 = arith.extui %8 : i1 to i32
    %c0_i32_4 = arith.constant 0 : i32
    %10 = arith.cmpi ne, %9, %c0_i32_4 : i32
    scf.if %10 {
      %c0 = arith.constant 0 : index
      %c0_5 = arith.constant 0 : index
      %11 = vector.load %arg3[%c0, %c0_5] : memref<4x128xf32, #tpu.memory_space<vmem>>, vector<4x128xf32>
      %cst = arith.constant 1.000000e+00 : f32
      %12 = vector.broadcast %cst : f32 to vector<4x128xf32>
      %13 = arith.mulf %12, %11 : vector<4x128xf32>
      %cst_6 = arith.constant 1.000000e+00 : f32
      %14 = vector.broadcast %cst_6 : f32 to vector<4x128xf32>
      %15 = arith.addf %14, %13 : vector<4x128xf32>
      %cst_7 = arith.constant 0.000000e+00 : f32
      %16 = vector.broadcast %cst_7 : f32 to vector<4x128xf32>
      %17 = arith.maximumf %15, %16 : vector<4x128xf32>
      %c0_8 = arith.constant 0 : index
      %c0_9 = arith.constant 0 : index
      %18 = vector.load %arg5[%c0_8, %c0_9] : memref<32x128xf32, #tpu.memory_space<vmem>>, vector<1x128xf32>
      %cst_10 = arith.constant dense<0.000000e+00> : vector<128xf32>
      %19 = vector.multi_reduction <add>, %17, %cst_10 [0] : vector<4x128xf32> to vector<128xf32>
      %20 = vector.shape_cast %19 : vector<128xf32> to vector<1x128xf32>
      %21 = arith.addf %18, %20 : vector<1x128xf32>
      %c0_11 = arith.constant 0 : index
      %c0_12 = arith.constant 0 : index
      %22 = vector.load %arg5[%c0_11, %c0_12] : memref<32x128xf32, #tpu.memory_space<vmem>>, vector<1x128xf32>
      tpu.vector_store %arg5[%c0_11, %c0_12], %21 {strides = array<i32>} : memref<32x128xf32, #tpu.memory_space<vmem>>, vector<1x128xf32>,
    } else {
    }
    return
  }
  func.func @transform_0(%arg0: i32, %arg1: i32) -> (i32, i32) {
    %c1_i32 = arith.constant 1 : i32
    %0 = arith.muli %arg0, %c1_i32 : i32
    %1 = arith.addi %0, %arg1 : i32
    %c0_i32 = arith.constant 0 : i32
    %2 = arith.minsi %1, %c0_i32 : i32
    %c0_i32_0 = arith.constant 0 : i32
    %c0_i32_1 = arith.constant 0 : i32
    return %2, %c0_i32_0 : i32, i32
  }
  func.func @transform_1(%arg0: i32, %arg1: i32) -> (i32, i32) {
    %c1_i32 = arith.constant 1 : i32
    %0 = arith.muli %arg0, %c1_i32 : i32
    %1 = arith.addi %0, %arg1 : i32
    %c0_i32 = arith.constant 0 : i32
    %2 = arith.minsi %1, %c0_i32 : i32
    %c0_i32_0 = arith.constant 0 : i32
    %c0_i32_1 = arith.constant 0 : i32
    return %2, %c0_i32_0 : i32, i32
  }
  func.func @transform_2(%arg0: i32, %arg1: i32) -> (i32, i32) {
    %c0_i32 = arith.constant 0 : i32
    %c0_i32_0 = arith.constant 0 : i32
    return %arg0, %c0_i32 : i32, i32
  }
  func.func @transform_3(%arg0: i32, %arg1: i32) -> (i32, i32) {
    %c0_i32 = arith.constant 0 : i32
    %c0_i32_0 = arith.constant 0 : i32
    return %arg0, %c0_i32 : i32, i32
  }
}

</mosaic_0001>

<llo_original>
// kernel: hinge_gan_d_loss.1
$region0: #{hinge_gan_d_loss.1}
  #allocation0 [shape = 'u32[]', space=smem, size = 0x4, offset = 0x4, fixed_abs, tag = 'smem constant byte address 0x4 - core index']
  #allocation1 [shape = 'u32[72,128]{1,0:T(1,128)}', space=vmem, size = 0x9000, scoped, tag = 'internal scratch']
  %s0 = inlined_call_operand.vmem [shape: f32[4,128], index: 0, kind: input, shape index: {}]
  %s1 = inlined_call_operand.vmem [shape: f32[4,128], index: 1, kind: input, shape index: {}]
  %s2 = inlined_call_operand.vmem [shape: f32[64,128], index: 2, kind: output, shape index: {0}]
  %s3 = inlined_call_operand.vmem [shape: f32[64,128], index: 3, kind: output, shape index: {1}]
  %4 = xla_tuple %s2, %s3
  %s5 = sld [smem:[#allocation0]]
  $region57: #{hinge_gan_d_loss.1} parent=0
    _
  %s7 = ssub.s32 1, %s5
  %s8 = scalar_select 0, %s7, %s5
  loop: start=0, step=1, limit=4
  $region2: #{hinge_gan_d_loss.1} parent=0 // loop_pre_header
    _
  $region3: #{hinge_gan_d_loss.1} parent=0 // loop_header
    %s10 = sphi 0, %s14
    %p11 = scmp.ge.s32.totalorder %s10, 4
    %s17 = sphi 0, %s29
    %s18 = sphi 0, %s25
    %s19 = sphi 0, %s17
    %s20 = sphi 0, %s18
    %s21 = sphi 0, %s19
    %s22 = sphi 0, %s20
    %s38 = sphi 0, %s40
    %s41 = sphi 0, %s38
    %s42 = sphi 0, %s41
    %s58 = sphi 0, %s42
    %s70 = sphi 0, %s72
    %s73 = sphi 0, %s70
    %s74 = sphi 0, %s73
    %s90 = sphi 0, %s74
    %s96 = sphi 0, %s98
    %s99 = sphi 0, %s96
    %s100 = sphi 0, %s99
    %s116 = sphi 0, %s100
    %s122 = sphi 0, %s124
    %s125 = sphi 0, %s122
    %s126 = sphi 0, %s125
    %s142 = sphi 0, %s126
  $region4: #{hinge_gan_d_loss.1} parent=0 // loop_header_branch
    %13 = sbr.rel (%p11) target = $region8
  $region5: #{hinge_gan_d_loss.1} parent=0 // loop_body
    %s15 = ssub.s32 %s10, 1
    %s16 = ssub.s32 %s10, 2
    %s23 = sadd.s32 1, %s18
    %p24 = scmp.ge.s32.totalorder %s23, 1
    %s25 = scalar_select %p24, 0, %s23
    %s26 = sadd.s32 1, %s17
    %s27 = scalar_select %p24, %s26, %s17
    %p28 = scmp.ge.s32.totalorder %s27, 2
    %s29 = scalar_select %p28, 0, %s27
    %s30 = sadd.s32 %s17, %s18
    %p31 = scmp.lt.s32.totalorder %s30, 0
    %s32 = scalar_select %p31, %s30, 0
    %s33 = sadd.s32 %s29, %s25
    %p34 = scmp.lt.s32.totalorder %s33, 0
    %s35 = scalar_select %p34, %s33, 0
    %s36 = ssub.s32 %s32, %s35
    %p37 = scmp.eq.s32.totalorder %s36, 0
    %s39 = sadd.s32 %s38, 1
    %s40 = scalar_select %p37, %s38, %s39
    %p43 = pneg %p37
    %p44 = scmp.eq.s32.totalorder %s10, 1
    %p45 = por %p43, %p44
    %p46 = scmp.ne.s32.totalorder %s38, %s41
    %p47 = scmp.eq.s32.totalorder %s10, 0
    %p48 = por %p46, %p47
    %p49 = scmp.ne.s32.totalorder %s38, %s41
    %p50 = scmp.eq.s32.totalorder %s15, 1
    %p51 = por %p49, %p50
    %p52 = scmp.ne.s32.totalorder %s41, %s42
    %p53 = scmp.eq.s32.totalorder %s15, 0
    %p54 = por %p52, %p53
    %p55 = scmp.ne.s32.totalorder %s41, %s42
    %p56 = scmp.eq.s32.totalorder %s16, 1
    %p57 = por %p55, %p56
    %p59 = scmp.ne.s32.totalorder %s42, %s58
    %p60 = scmp.eq.s32.totalorder %s16, 0
    %p61 = por %p59, %p60
    %s62 = sadd.s32 %s17, %s18
    %p63 = scmp.lt.s32.totalorder %s62, 0
    %s64 = scalar_select %p63, %s62, 0
    %s65 = sadd.s32 %s29, %s25
    %p66 = scmp.lt.s32.totalorder %s65, 0
    %s67 = scalar_select %p66, %s65, 0
    %s68 = ssub.s32 %s64, %s67
    %p69 = scmp.eq.s32.totalorder %s68, 0
    %s71 = sadd.s32 %s70, 1
    %s72 = scalar_select %p69, %s70, %s71
    %p75 = pneg %p69
    %p76 = scmp.eq.s32.totalorder %s10, 1
    %p77 = por %p75, %p76
    %p78 = scmp.ne.s32.totalorder %s70, %s73
    %p79 = scmp.eq.s32.totalorder %s10, 0
    %p80 = por %p78, %p79
    %p81 = scmp.ne.s32.totalorder %s70, %s73
    %p82 = scmp.eq.s32.totalorder %s15, 1
    %p83 = por %p81, %p82
    %p84 = scmp.ne.s32.totalorder %s73, %s74
    %p85 = scmp.eq.s32.totalorder %s15, 0
    %p86 = por %p84, %p85
    %p87 = scmp.ne.s32.totalorder %s73, %s74
    %p88 = scmp.eq.s32.totalorder %s16, 1
    %p89 = por %p87, %p88
    %p91 = scmp.ne.s32.totalorder %s74, %s90
    %p92 = scmp.eq.s32.totalorder %s16, 0
    %p93 = por %p91, %p92
    %s94 = ssub.s32 %s17, %s29
    %p95 = scmp.eq.s32.totalorder %s94, 0
    %s97 = sadd.s32 %s96, 1
    %s98 = scalar_select %p95, %s96, %s97
    %p101 = pneg %p95
    %p102 = scmp.eq.s32.totalorder %s10, 1
    %p103 = por %p101, %p102
    %p104 = scmp.ne.s32.totalorder %s96, %s99
    %p105 = scmp.eq.s32.totalorder %s10, 0
    %p106 = por %p104, %p105
    %p107 = scmp.ne.s32.totalorder %s96, %s99
    %p108 = scmp.eq.s32.totalorder %s15, 1
    %p109 = por %p107, %p108
    %p110 = scmp.ne.s32.totalorder %s99, %s100
    %p111 = scmp.eq.s32.totalorder %s15, 0
    %p112 = por %p110, %p111
    %p113 = scmp.ne.s32.totalorder %s99, %s100
    %p114 = scmp.eq.s32.totalorder %s16, 1
    %p115 = por %p113, %p114
    %p117 = scmp.ne.s32.totalorder %s100, %s116
    %p118 = scmp.eq.s32.totalorder %s16, 0
    %p119 = por %p117, %p118
    %s120 = ssub.s32 %s17, %s29
    %p121 = scmp.eq.s32.totalorder %s120, 0
    %s123 = sadd.s32 %s122, 1
    %s124 = scalar_select %p121, %s122, %s123
    %p127 = pneg %p121
    %p128 = scmp.eq.s32.totalorder %s10, 1
    %p129 = por %p127, %p128
    %p130 = scmp.ne.s32.totalorder %s122, %s125
    %p131 = scmp.eq.s32.totalorder %s10, 0
    %p132 = por %p130, %p131
    %p133 = scmp.ne.s32.totalorder %s122, %s125
    %p134 = scmp.eq.s32.totalorder %s15, 1
    %p135 = por %p133, %p134
    %p136 = scmp.ne.s32.totalorder %s125, %s126
    %p137 = scmp.eq.s32.totalorder %s15, 0
    %p138 = por %p136, %p137
    %p139 = scmp.ne.s32.totalorder %s125, %s126
    %p140 = scmp.eq.s32.totalorder %s16, 1
    %p141 = por %p139, %p140
    %p143 = scmp.ne.s32.totalorder %s126, %s142
    %p144 = scmp.eq.s32.totalorder %s16, 0
    %p145 = por %p143, %p144
    %p146 = scmp.le.s32.totalorder 1, %s10
    %p147 = scmp.lt.s32.totalorder %s10, 3
    %p148 = pnand %p146, %p147
    %p149 = pneg %p148
    // Predicated region
    $region9: #{hinge_gan_d_loss.1} parent=5 // pred_check
      _
    $region10: #{hinge_gan_d_loss.1} parent=5 // pred_check_branch
      %151 = sbr.rel (%p148) target = $region12
    $region11: #{hinge_gan_d_loss.1} parent=5 // pred_region
      %s152 = ssub.s32 %s10, 1
    $region12: #{hinge_gan_d_loss.1} parent=5 // pred_fallthru
      _
    %p153 = scmp.lt.s32.totalorder %s10, 2
    // Predicated region
    $region13: #{hinge_gan_d_loss.1} parent=5 // pred_check
      %p154 = pneg %p153
    $region14: #{hinge_gan_d_loss.1} parent=5 // pred_check_branch
      %156 = sbr.rel (%p154) target = $region16
    $region15: #{hinge_gan_d_loss.1} parent=5 // pred_region
      // Predicated region
      $region17: #{hinge_gan_d_loss.1} parent=15 // pred_check
        %p157 = pneg %p48
      $region18: #{hinge_gan_d_loss.1} parent=15 // pred_check_branch
        %159 = sbr.rel (%p157) target = $region20
      $region19: #{hinge_gan_d_loss.1} parent=15 // pred_region
        %s160 = sadd.s32 %s17, %s18
        %p161 = scmp.lt.s32.totalorder %s160, 0
        %s162 = scalar_select %p161, %s160, 0
        %p163 = scmp.lt.s32.totalorder %s162, 0
        %s164 = scalar_select %p163, %s162, 0
        %s165 = smul.addr %s164, 4
        %s166 = scalar_lea.vmem %s0, %s165
        %s167 = sadd.s32 %s17, %s18
        %p168 = scmp.lt.s32.totalorder %s167, 0
        %s169 = scalar_select %p168, %s167, 0
      $region20: #{hinge_gan_d_loss.1} parent=15 // pred_fallthru
        _
      // Predicated region
      $region21: #{hinge_gan_d_loss.1} parent=15 // pred_check
        %p170 = pneg %p80
      $region22: #{hinge_gan_d_loss.1} parent=15 // pred_check_branch
        %172 = sbr.rel (%p170) target = $region24
      $region23: #{hinge_gan_d_loss.1} parent=15 // pred_region
        %s173 = sadd.s32 %s17, %s18
        %p174 = scmp.lt.s32.totalorder %s173, 0
        %s175 = scalar_select %p174, %s173, 0
        %p176 = scmp.lt.s32.totalorder %s175, 0
        %s177 = scalar_select %p176, %s175, 0
        %s178 = smul.addr %s177, 4
        %s179 = scalar_lea.vmem %s1, %s178
        %s180 = sadd.s32 %s17, %s18
        %p181 = scmp.lt.s32.totalorder %s180, 0
        %s182 = scalar_select %p181, %s180, 0
      $region24: #{hinge_gan_d_loss.1} parent=15 // pred_fallthru
        _
    $region16: #{hinge_gan_d_loss.1} parent=5 // pred_fallthru
      _
    %p183 = scmp.le.s32.totalorder 1, %s10
    %p184 = scmp.lt.s32.totalorder %s10, 3
    %p185 = pnand %p183, %p184
    %p186 = pneg %p185
    // Predicated region
    $region25: #{hinge_gan_d_loss.1} parent=5 // pred_check
      _
    $region26: #{hinge_gan_d_loss.1} parent=5 // pred_check_branch
      %188 = sbr.rel (%p185) target = $region28
    $region27: #{hinge_gan_d_loss.1} parent=5 // pred_region
      %s189 = ssub.s32 %s10, 1
      %s190 = sadd.s32 %s19, %s20
      %p191 = scmp.lt.s32.totalorder %s190, 0
      %s192 = scalar_select %p191, %s190, 0
      %p193 = scmp.lt.s32.totalorder %s192, 0
      %s194 = scalar_select %p193, %s192, 0
      %s195 = smul.addr %s194, 4
      %s196 = scalar_lea.vmem %s0, %s195
      %p197 = pneg %p54
      %p198 = pneg %p51
      %s199 = sadd.s32 %s19, %s20
      %p200 = scmp.lt.s32.totalorder %s199, 0
      %s201 = scalar_select %p200, %s199, 0
      %p202 = scmp.lt.s32.totalorder %s201, 0
      %s203 = scalar_select %p202, %s201, 0
      %s204 = smul.addr %s203, 4
      %s205 = scalar_lea.vmem %s1, %s204
      %p206 = pneg %p86
      %p207 = pneg %p83
      %p208 = pneg %p112
      %p209 = pneg %p109
      %s210 = smul.u32 4, %s19
      %p211 = scmp.lt.s32.totalorder %s210, 7
      %s212 = scalar_select %p211, %s210, 7
      %s213 = smul.addr %s212, 8
      %s214 = scalar_lea.vmem %s2, %s213
      %p215 = pneg %p138
      %p216 = pneg %p135
      %s217 = smul.u32 4, %s19
      %p218 = scmp.lt.s32.totalorder %s217, 7
      %s219 = scalar_select %p218, %s217, 7
      %s220 = smul.addr %s219, 8
      %s221 = scalar_lea.vmem %s3, %s220
      %s222 = sadd.s32 %s19, %s20
      %p223 = scmp.lt.s32.totalorder %s222, 0
      %s224 = scalar_select %p223, %s222, 0
      %p225 = scmp.lt.s32.totalorder %s224, 0
      %s226 = scalar_select %p225, %s224, 0
      %s227 = smul.addr %s226, 4
      %s228 = scalar_lea.vmem %s0, %s227
      %s229 = sadd.s32 %s19, %s20
      %p230 = scmp.lt.s32.totalorder %s229, 0
      %s231 = scalar_select %p230, %s229, 0
      %s232 = sadd.s32 %s19, %s20
      %p233 = scmp.lt.s32.totalorder %s232, 0
      %s234 = scalar_select %p233, %s232, 0
      %p235 = scmp.lt.s32.totalorder %s234, 0
      %s236 = scalar_select %p235, %s234, 0
      %s237 = smul.addr %s236, 4
      %s238 = scalar_lea.vmem %s1, %s237
      %s239 = sadd.s32 %s19, %s20
      %p240 = scmp.lt.s32.totalorder %s239, 0
      %s241 = scalar_select %p240, %s239, 0
      %s242 = smul.u32 4, %s19
      %p243 = scmp.lt.s32.totalorder %s242, 7
      %s244 = scalar_select %p243, %s242, 7
      %s245 = smul.addr %s244, 8
      %s246 = scalar_lea.vmem %s2, %s245
      %s247 = smul.u32 4, %s19
      %s248 = smul.u32 4, %s19
      %p249 = scmp.lt.s32.totalorder %s248, 7
      %s250 = scalar_select %p249, %s248, 7
      %s251 = smul.addr %s250, 8
      %s252 = scalar_lea.vmem %s3, %s251
      %s253 = smul.u32 4, %s19
      %s254 = sadd.s32 %s19, %s20
      %p255 = scmp.eq.s32.totalorder %s20, 0
      // Predicated region
      $region29: #{hinge_gan_d_loss.1} parent=27 // pred_check
        %p256 = pneg %p255
      $region30: #{hinge_gan_d_loss.1} parent=27 // pred_check_branch
        %258 = sbr.rel (%p256) target = $region32
      $region31: #{hinge_gan_d_loss.1} parent=27 // pred_region
        %259 = vst [vmem:[%s246] sm:$0xff] 0.0
        %260 = vst [vmem:[%s246 + $0x8] sm:$0xff] 0.0
        %261 = vst [vmem:[%s246 + $0x10] sm:$0xff] 0.0
        %262 = vst [vmem:[%s246 + $0x18] sm:$0xff] 0.0
        %263 = vst [vmem:[%s252] sm:$0xff] 0.0
        %264 = vst [vmem:[%s252 + $0x8] sm:$0xff] 0.0
        %265 = vst [vmem:[%s252 + $0x10] sm:$0xff] 0.0
        %266 = vst [vmem:[%s252 + $0x18] sm:$0xff] 0.0
      $region32: #{hinge_gan_d_loss.1} parent=27 // pred_fallthru
        _
      %p267 = scmp.lt.s32.totalorder %s254, 1
      // Predicated region
      $region33: #{hinge_gan_d_loss.1} parent=27 // pred_check
        %p268 = pneg %p267
      $region34: #{hinge_gan_d_loss.1} parent=27 // pred_check_branch
        %270 = sbr.rel (%p268) target = $region36
      $region35: #{hinge_gan_d_loss.1} parent=27 // pred_region
        %v271 = vld [vmem:[%s228] sm:$0xf]
        %v272 = vmul.f32 %v271, -1.0
        %v273 = vadd.f32 %v272, 1.0
        %v274 = vmax.f32 %v273, 0.0
        %v275 = vld [vmem:[%s246] sm:$0x1]
        %vm276 = vcmask 1043456
        %v277 = vsel %vm276, %v274, 0.0
        %v278 = vrot.slane %v277, 4
        %v279 = vadd.f32 %v277, %v278
        %v280 = vrot.slane %v279, 2
        %v281 = vadd.f32 %v279, %v280
        %v282 = vrot.slane %v281, 1
        %v283 = vadd.f32 %v281, %v282
        %v284 = vadd.f32 %v275, %v283
        %285 = vst [vmem:[%s246] sm:$0x1] %v284
        %v286 = vld [vmem:[%s238] sm:$0xf]
        %v287 = vadd.f32 %v286, 1.0
        %v288 = vmax.f32 %v287, 0.0
        %v289 = vld [vmem:[%s252] sm:$0x1]
        %v290 = vsel %vm276, %v288, 0.0
        %v291 = vrot.slane %v290, 4
        %v292 = vadd.f32 %v290, %v291
        %v293 = vrot.slane %v292, 2
        %v294 = vadd.f32 %v292, %v293
        %v295 = vrot.slane %v294, 1
        %v296 = vadd.f32 %v294, %v295
        %v297 = vadd.f32 %v289, %v296
        %298 = vst [vmem:[%s252] sm:$0x1] %v297
      $region36: #{hinge_gan_d_loss.1} parent=27 // pred_fallthru
        _
      %s299 = smul.u32 4, %s19
      %p300 = scmp.lt.s32.totalorder %s299, 7
      %s301 = scalar_select %p300, %s299, 7
      %s302 = smul.addr %s301, 8
      %s303 = scalar_lea.vmem %s2, %s302
      %s304 = smul.u32 4, %s19
      %p305 = scmp.lt.s32.totalorder %s304, 7
      %s306 = scalar_select %p305, %s304, 7
      %s307 = smul.addr %s306, 8
      %s308 = scalar_lea.vmem %s3, %s307
      // Predicated region
      $region37: #{hinge_gan_d_loss.1} parent=27 // pred_check
        %p309 = pneg %p109
      $region38: #{hinge_gan_d_loss.1} parent=27 // pred_check_branch
        %311 = sbr.rel (%p309) target = $region40
      $region39: #{hinge_gan_d_loss.1} parent=27 // pred_region
        %s312 = smul.u32 4, %s19
      $region40: #{hinge_gan_d_loss.1} parent=27 // pred_fallthru
        _
      // Predicated region
      $region41: #{hinge_gan_d_loss.1} parent=27 // pred_check
        %p313 = pneg %p135
      $region42: #{hinge_gan_d_loss.1} parent=27 // pred_check_branch
        %315 = sbr.rel (%p313) target = $region44
      $region43: #{hinge_gan_d_loss.1} parent=27 // pred_region
        %s316 = smul.u32 4, %s19
      $region44: #{hinge_gan_d_loss.1} parent=27 // pred_fallthru
        _
    $region28: #{hinge_gan_d_loss.1} parent=5 // pred_fallthru
      _
    %p317 = scmp.le.s32.totalorder 2, %s10
    // Predicated region
    $region45: #{hinge_gan_d_loss.1} parent=5 // pred_check
      %p318 = pneg %p317
    $region46: #{hinge_gan_d_loss.1} parent=5 // pred_check_branch
      %320 = sbr.rel (%p318) target = $region48
    $region47: #{hinge_gan_d_loss.1} parent=5 // pred_region
      %s321 = ssub.s32 %s10, 2
      // Predicated region
      $region49: #{hinge_gan_d_loss.1} parent=47 // pred_check
        %p322 = pneg %p115
      $region50: #{hinge_gan_d_loss.1} parent=47 // pred_check_branch
        %324 = sbr.rel (%p322) target = $region52
      $region51: #{hinge_gan_d_loss.1} parent=47 // pred_region
        %s325 = smul.u32 4, %s21
        %p326 = scmp.lt.s32.totalorder %s325, 7
        %s327 = scalar_select %p326, %s325, 7
        %s328 = smul.addr %s327, 8
        %s329 = scalar_lea.vmem %s2, %s328
      $region52: #{hinge_gan_d_loss.1} parent=47 // pred_fallthru
        _
      // Predicated region
      $region53: #{hinge_gan_d_loss.1} parent=47 // pred_check
        %p330 = pneg %p141
      $region54: #{hinge_gan_d_loss.1} parent=47 // pred_check_branch
        %332 = sbr.rel (%p330) target = $region56
      $region55: #{hinge_gan_d_loss.1} parent=47 // pred_region
        %s333 = smul.u32 4, %s21
        %p334 = scmp.lt.s32.totalorder %s333, 7
        %s335 = scalar_select %p334, %s333, 7
        %s336 = smul.addr %s335, 8
        %s337 = scalar_lea.vmem %s3, %s336
      $region56: #{hinge_gan_d_loss.1} parent=47 // pred_fallthru
        _
    $region48: #{hinge_gan_d_loss.1} parent=5 // pred_fallthru
      _
  $region6: #{hinge_gan_d_loss.1} parent=0 // loop_footer
    %s14 = sadd.s32 1, %s10
  $region7: #{hinge_gan_d_loss.1} parent=0 // loop_footer_branch
    %9 = sbr.rel target = $region3
  $region8: #{hinge_gan_d_loss.1} parent=0 // loop_exit
    _

</llo_original>
